<compile_context>
chip_gen: v6e
topology: v6e:2x2x1
jax: 0.10.0
libtpu: 0.0.40
codegen_flags: <defaults>
</compile_context>

<pallas_src>
import jax
import jax.numpy as jnp
from jax import lax
from jax.experimental import pallas as pl
from jax.experimental.pallas import tpu as pltpu


def _adaptive_abstraction_kernel(aw_ref, x_ref, w_ref, b_ref, o_ref, wacc_ref):
    a = pl.program_id(1)          # reduction axis over abstractions (innermost)

    # Stream W_a tile [tile_out, IN] in native PyTorch layout and fold it into
    # the effective weight:  W_eff (+)= aw[a] * W_a   (pure VPU axpy, no MXU).
    # First step writes directly (no zero-init pass over the scratch).
    @pl.when(a == 0)
    def _():
        wacc_ref[...] = aw_ref[0] * w_ref[0].astype(jnp.float32)

    @pl.when(a > 0)
    def _():
        wacc_ref[...] += aw_ref[a] * w_ref[0].astype(jnp.float32)

    @pl.when(a == pl.num_programs(1) - 1)
    def _():
        # Single matmul per OUT tile: x [B, IN] . W_eff^T [tile_out, IN]
        # -> [B, tile_out]  (contract dim 1 of each operand; no transpose op).
        y = lax.dot_general(
            x_ref[...].astype(jnp.float32),
            wacc_ref[...],
            dimension_numbers=(((1,), (1,)), ((), ())),
            preferred_element_type=jnp.float32,
        )
        o_ref[...] = (y + b_ref[...]).astype(o_ref.dtype)


def _pick_tile_out(out_features, in_features, *, budget_bytes=4 * 1024 * 1024):
    """Largest OUT tile whose f32 weight slab [tile_out, IN] fits the budget.

    Prefers multiples of 128 that divide OUT (lane-dense stores, valid
    (8,128)-tiled BlockSpec); falls back to the full OUT dim for small layers
    (a block equal to the full array dim is always legal).
    """
    if out_features * in_features * 4 <= budget_bytes:
        return out_features
    max_rows = max(1, budget_bytes // (in_features * 4))
    t = (max_rows // 128) * 128
    while t >= 128:
        if out_features % t == 0:
            return t
        t -= 128
    # TODO(synk): no 128-multiple divisor of OUT fits the budget; stay correct
    # with the full OUT dim (may exceed the intended VMEM budget).
    return out_features


def adaptive_abstraction_layer(x, weights, biases, abstraction_weights,
                               *, tile_out=None):
    """
    x:                   [B, IN]        float32
    weights:             [A, OUT, IN]   float32 (PyTorch nn.Linear layout)
    biases:              [A, OUT]       float32
    abstraction_weights: [A]            float32
    returns:             [B, OUT]       float32
    """
    B, IN = x.shape
    A, OUT, IN2 = weights.shape
    assert IN == IN2 and biases.shape == (A, OUT)
    assert abstraction_weights.shape == (A,)

    if tile_out is None:
        tile_out = _pick_tile_out(OUT, IN)
    assert OUT % tile_out == 0, (OUT, tile_out)
    n_out_tiles = OUT // tile_out

    # Hoist the bias: b_eff = sum_a aw[a] * b_a  (tiny A*OUT wrapper-side op).
    b_eff = (abstraction_weights @ biases).reshape(1, OUT)

    return pl.pallas_call(
        _adaptive_abstraction_kernel,
        out_shape=jax.ShapeDtypeStruct((B, OUT), x.dtype),
        grid_spec=pltpu.PrefetchScalarGridSpec(
            num_scalar_prefetch=0,
            grid=(n_out_tiles, A),          # OUT tiles outermost, A innermost
            in_specs=[
                pl.BlockSpec(memory_space=pltpu.SMEM),                    # aw
                pl.BlockSpec((B, IN), lambda j, a: (0, 0)),               # x (resident)
                pl.BlockSpec((1, tile_out, IN), lambda j, a: (a, j, 0)),  # W_a tile
                pl.BlockSpec((1, tile_out), lambda j, a: (0, j)),         # b_eff tile
            ],
            out_specs=pl.BlockSpec((B, tile_out), lambda j, a: (0, j)),
            scratch_shapes=[pltpu.VMEM((tile_out, IN), jnp.float32)],     # W_eff acc
        ),
        compiler_params=pltpu.CompilerParams(
            dimension_semantics=("parallel", "arbitrary"),
            vmem_limit_bytes=32 * 1024 * 1024,
        ),
    )(abstraction_weights, x, weights, b_eff)


def reference(x, weights, biases, abstraction_weights):
    # Pure-JAX reference mirroring the PyTorch forward.
    outs = jnp.einsum("bi,aoi->abo", x, weights) + biases[:, None, :]  # [A, B, OUT]
    return jnp.sum(abstraction_weights[:, None, None] * outs, axis=0)


def _make_inputs(key, B, IN, OUT, A):
    k_x, k_w, k_b, k_a = jax.random.split(key, 4)
    x = jax.random.normal(k_x, (B, IN), dtype=jnp.float32)
    bound = 1.0 / jnp.sqrt(jnp.float32(IN))
    weights = jax.random.uniform(k_w, (A, OUT, IN), minval=-bound, maxval=bound,
                                 dtype=jnp.float32)
    biases = jax.random.uniform(k_b, (A, OUT), minval=-bound, maxval=bound,
                                dtype=jnp.float32)
    # Non-uniform mixture weights so the per-abstraction scaling is exercised.
    abstraction_weights = jax.nn.softmax(
        jax.random.normal(k_a, (A,), dtype=jnp.float32))
    return x, weights, biases, abstraction_weights


if __name__ == "__main__":
    key = jax.random.PRNGKey(0)
    k0, k1 = jax.random.split(key)

    # Small shape consistent with the module (single OUT tile path).
    B, IN, OUT, A = 2, 32, 32, 3
    x, w, b, aw = _make_inputs(k0, B, IN, OUT, A)
    out = jax.block_until_ready(adaptive_abstraction_layer(x, w, b, aw))
    ref = reference(x, w, b, aw)
    assert out.shape == (B, OUT)
    assert jnp.allclose(out, ref, atol=1e-5, rtol=1e-5), "mismatch vs reference (small)"

    # Exercise the multi-tile (parallel OUT axis) path explicitly.
    B2, IN2, OUT2, A2 = 4, 128, 256, 3
    x2, w2, b2, aw2 = _make_inputs(k1, B2, IN2, OUT2, A2)
    out2 = jax.block_until_ready(
        adaptive_abstraction_layer(x2, w2, b2, aw2, tile_out=128))
    ref2 = reference(x2, w2, b2, aw2)
    assert out2.shape == (B2, OUT2)
    assert jnp.allclose(out2, ref2, atol=1e-4, rtol=1e-5), "mismatch vs reference (tiled)"

    print("KERNEL_OK")
</pallas_src>

<mosaic_0001>
module attributes {stable_mosaic.version = 11 : i64} {
  func.func @_adaptive_abstraction_kernel(%arg0: i32, %arg1: i32, %arg2: memref<3xf32, #tpu.memory_space<smem>>, %arg3: memref<2x32xf32, #tpu.memory_space<vmem>>, %arg4: memref<1x32x32xf32, #tpu.memory_space<vmem>>, %arg5: memref<1x32xf32, #tpu.memory_space<vmem>>, %arg6: memref<2x32xf32, #tpu.memory_space<vmem>>, %arg7: memref<32x32xf32, #tpu.memory_space<vmem>>) attributes {dimension_semantics = [#tpu.dimension_semantics<parallel>, #tpu.dimension_semantics<arbitrary>], iteration_bounds = array<i64: 1, 3>, scalar_prefetch = 0 : i64, scratch_operands = 1 : i64, tpu.core_type = #tpu.core_type<tc>, window_params = [{transform_indices = @transform_0, window_bounds = array<i64: 3>}, {pipeline_mode = #tpu.pipeline_mode<synchronous>, transform_indices = @transform_1, window_bounds = array<i64: 2, 32>}, {transform_indices = @transform_2, window_bounds = array<i64: 1, 32, 32>}, {transform_indices = @transform_3, window_bounds = array<i64: 1, 32>}, {transform_indices = @transform_4, window_bounds = array<i64: 2, 32>}]} {
    %c0_i32 = arith.constant 0 : i32
    %0 = arith.cmpi eq, %arg1, %c0_i32 : i32
    %1 = arith.extui %0 : i1 to i32
    %c0_i32_0 = arith.constant 0 : i32
    %2 = arith.cmpi ne, %1, %c0_i32_0 : i32
    scf.if %2 {
      %c0 = arith.constant 0 : index
      %9 = memref.load %arg2[%c0] : memref<3xf32, #tpu.memory_space<smem>>
      %c0_4 = arith.constant 0 : index
      %c0_5 = arith.constant 0 : index
      %c0_6 = arith.constant 0 : index
      %10 = vector.load %arg4[%c0_4, %c0_5, %c0_6] : memref<1x32x32xf32, #tpu.memory_space<vmem>>, vector<1x32x32xf32>
      %11 = vector.shape_cast %10 : vector<1x32x32xf32> to vector<32x32xf32>
      %12 = vector.broadcast %9 : f32 to vector<32x32xf32>
      %13 = arith.mulf %12, %11 : vector<32x32xf32>
      %c0_7 = arith.constant 0 : index
      %c0_8 = arith.constant 0 : index
      %14 = vector.load %arg7[%c0_7, %c0_8] : memref<32x32xf32, #tpu.memory_space<vmem>>, vector<32x32xf32>
      tpu.vector_store %arg7[%c0_7, %c0_8], %13 {strides = array<i32>} : memref<32x32xf32, #tpu.memory_space<vmem>>, vector<32x32xf32>,
    } else {
    }
    %c0_i32_1 = arith.constant 0 : i32
    %3 = arith.cmpi sgt, %arg1, %c0_i32_1 : i32
    %4 = arith.extui %3 : i1 to i32
    %c0_i32_2 = arith.constant 0 : i32
    %5 = arith.cmpi ne, %4, %c0_i32_2 : i32
    scf.if %5 {
      %c0 = arith.constant 0 : index
      %c0_4 = arith.constant 0 : index
      %9 = vector.load %arg7[%c0, %c0_4] : memref<32x32xf32, #tpu.memory_space<vmem>>, vector<32x32xf32>
      %10 = arith.index_cast %arg1 : i32 to index
      %11 = memref.load %arg2[%10] : memref<3xf32, #tpu.memory_space<smem>>
      %c0_5 = arith.constant 0 : index
      %c0_6 = arith.constant 0 : index
      %c0_7 = arith.constant 0 : index
      %12 = vector.load %arg4[%c0_5, %c0_6, %c0_7] : memref<1x32x32xf32, #tpu.memory_space<vmem>>, vector<1x32x32xf32>
      %13 = vector.shape_cast %12 : vector<1x32x32xf32> to vector<32x32xf32>
      %14 = vector.broadcast %11 : f32 to vector<32x32xf32>
      %15 = arith.mulf %14, %13 : vector<32x32xf32>
      %16 = arith.addf %9, %15 : vector<32x32xf32>
      %c0_8 = arith.constant 0 : index
      %c0_9 = arith.constant 0 : index
      %17 = vector.load %arg7[%c0_8, %c0_9] : memref<32x32xf32, #tpu.memory_space<vmem>>, vector<32x32xf32>
      tpu.vector_store %arg7[%c0_8, %c0_9], %16 {strides = array<i32>} : memref<32x32xf32, #tpu.memory_space<vmem>>, vector<32x32xf32>,
    } else {
    }
    %c2_i32 = arith.constant 2 : i32
    %6 = arith.cmpi eq, %arg1, %c2_i32 : i32
    %7 = arith.extui %6 : i1 to i32
    %c0_i32_3 = arith.constant 0 : i32
    %8 = arith.cmpi ne, %7, %c0_i32_3 : i32
    scf.if %8 {
      %c0 = arith.constant 0 : index
      %c0_4 = arith.constant 0 : index
      %9 = vector.load %arg3[%c0, %c0_4] : memref<2x32xf32, #tpu.memory_space<vmem>>, vector<2x32xf32>
      %c0_5 = arith.constant 0 : index
      %c0_6 = arith.constant 0 : index
      %10 = vector.load %arg7[%c0_5, %c0_6] : memref<32x32xf32, #tpu.memory_space<vmem>>, vector<32x32xf32>
      %cst = arith.constant dense<0.000000e+00> : vector<2x32xf32>
      %11 = tpu.matmul %9, %10, %cst {dimension_numbers = #tpu.dot_dimension_numbers<[1], [1], [0], [0], [0, 0, 1, 0], [], []>} : vector<2x32xf32>, vector<32x32xf32>, vector<2x32xf32> -> vector<2x32xf32>
      %c0_7 = arith.constant 0 : index
      %c0_8 = arith.constant 0 : index
      %12 = vector.load %arg5[%c0_7, %c0_8] : memref<1x32xf32, #tpu.memory_space<vmem>>, vector<1x32xf32>
      %13 = vector.broadcast %12 : vector<1x32xf32> to vector<2x32xf32>
      %14 = arith.addf %11, %13 : vector<2x32xf32>
      %c0_9 = arith.constant 0 : index
      %c0_10 = arith.constant 0 : index
      %15 = vector.load %arg6[%c0_9, %c0_10] : memref<2x32xf32, #tpu.memory_space<vmem>>, vector<2x32xf32>
      tpu.vector_store %arg6[%c0_9, %c0_10], %14 {strides = array<i32>} : memref<2x32xf32, #tpu.memory_space<vmem>>, vector<2x32xf32>,
    } else {
    }
    return
  }
  func.func @transform_0(%arg0: i32, %arg1: i32) -> i32 {
    %c0_i32 = arith.constant 0 : i32
    %c0_i32_0 = arith.constant 0 : i32
    return %c0_i32 : i32
  }
  func.func @transform_1(%arg0: i32, %arg1: i32) -> (i32, i32) {
    %c0_i32 = arith.constant 0 : i32
    %c0_i32_0 = arith.constant 0 : i32
    %c0_i32_1 = arith.constant 0 : i32
    return %c0_i32, %c0_i32_0 : i32, i32
  }
  func.func @transform_2(%arg0: i32, %arg1: i32) -> (i32, i32, i32) {
    %c0_i32 = arith.constant 0 : i32
    %c0_i32_0 = arith.constant 0 : i32
    return %arg1, %arg0, %c0_i32 : i32, i32, i32
  }
  func.func @transform_3(%arg0: i32, %arg1: i32) -> (i32, i32) {
    %c0_i32 = arith.constant 0 : i32
    %c0_i32_0 = arith.constant 0 : i32
    return %c0_i32, %arg0 : i32, i32
  }
  func.func @transform_4(%arg0: i32, %arg1: i32) -> (i32, i32) {
    %c0_i32 = arith.constant 0 : i32
    %c0_i32_0 = arith.constant 0 : i32
    return %c0_i32, %arg0 : i32, i32
  }
}

</mosaic_0001>

<llo_original>
// kernel: tpu_custom_call.1
$region0: #{tpu_custom_call.1}
  #allocation0 [shape = 'u32[]', space=smem, size = 0x4, offset = 0x4, fixed_abs, tag = 'smem constant byte address 0x4 - core index']
  #allocation1 [shape = 'u32[144,128]{1,0:T(1,128)}', space=vmem, size = 0x12000, scoped, tag = 'internal scratch']
  #allocation2 [shape = 'f32[32,32]{1,0:T(8,128)}', space=vmem, size = 0x4000, scoped, tag = 'scratch operand']
  %s0 = inlined_call_operand.hbm [shape: f32[3], index: 0, kind: input, shape index: {}]
  %s1 = inlined_call_operand.hbm [shape: f32[2,32], index: 1, kind: input, shape index: {}]
  %s2 = inlined_call_operand.hbm [shape: f32[3,32,32], index: 2, kind: input, shape index: {}]
  %s3 = inlined_call_operand.vmem [shape: f32[1,32], index: 3, kind: input, shape index: {}]
  %s4 = inlined_call_operand.hbm [shape: f32[2,32], index: 4, kind: output, shape index: {}]
  %s5 = sld [smem:[#allocation0]]
  $region73: #{tpu_custom_call.1} parent=0
    _
  %s7 = ssub.s32 1, %s5
  %s8 = scalar_select 0, %s7, %s5
  $region1: #{tpu_custom_call.1} parent=0
    #allocation3 [shape = 'u8[512]{0}', space=smem, size = 0x200, scoped, tag = 'input window, operand 0, single buffered']
    #allocation4 [shape = 's32[2]{0}', space=sflag, size = 0x8, scoped, tag = 'scoped memory for tpu_custom_call.1']
    #allocation5 [shape = 's32[2]{0}', space=sflag, size = 0x8, scoped, tag = 'scoped memory for tpu_custom_call.1']
    #allocation6 [shape = 's32[2]{0}', space=sflag, size = 0x8, scoped, tag = 'scoped memory for tpu_custom_call.1']
    #allocation7 [shape = 'u8[1024]{0}', space=vmem, size = 0x400, scoped, tag = 'input window, operand 1, single buffered']
    #allocation8 [shape = 'u8[32768]{0}', space=vmem, size = 0x8000, scoped, tag = 'input window, operand 2']
    #allocation9 [shape = 's32[2]{0}', space=sflag, size = 0x8, scoped, tag = 'scoped memory for tpu_custom_call.1']
    #allocation10 [shape = 'u8[1024]{0}', space=vmem, size = 0x400, scoped, tag = 'output window, operand 0, single buffered']
    %9 = vsyncpa [#allocation6], 0
    %10 = vsyncpa [#allocation4], 0
    %11 = vsyncpa [#allocation9], 0
    %s12 = scalar_lea.sflag [#allocation9], 1
    %13 = vsyncpa %s12, 0
    %14 = vsyncpa [#allocation5], 0
    loop: start=0, step=1, limit=5
    $region2: #{tpu_custom_call.1} parent=1 // loop_pre_header
      _
    $region3: #{tpu_custom_call.1} parent=1 // loop_header
      %s16 = sphi 0, %s20
      %p17 = scmp.ge.s32.totalorder %s16, 5
      %s23 = sphi 0, %s35
      %s24 = sphi 0, %s31
      %s25 = sphi 0, %s23
      %s26 = sphi 0, %s24
      %s27 = sphi 0, %s25
      %s28 = sphi 0, %s26
      %s36 = sphi 0, %s36
      %s38 = sphi 0, %s36
      %s39 = sphi 0, %s38
      %s53 = sphi 0, %s39
      %s57 = sphi 0, %s57
      %s59 = sphi 0, %s57
      %s60 = sphi 0, %s59
      %s74 = sphi 0, %s60
      %s82 = sphi 0, %s84
      %s85 = sphi 0, %s82
      %s86 = sphi 0, %s85
      %s102 = sphi 0, %s86
      %s108 = sphi 0, %s110
      %s111 = sphi 0, %s108
      %s112 = sphi 0, %s111
      %s128 = sphi 0, %s112
      %s134 = sphi 0, %s136
      %s137 = sphi 0, %s134
      %s138 = sphi 0, %s137
      %s154 = sphi 0, %s138
    $region4: #{tpu_custom_call.1} parent=1 // loop_header_branch
      %19 = sbr.rel (%p17) target = $region8
    $region5: #{tpu_custom_call.1} parent=1 // loop_body
      %s21 = ssub.s32 %s16, 1
      %s22 = ssub.s32 %s16, 2
      %s29 = sadd.s32 1, %s24
      %p30 = scmp.ge.s32.totalorder %s29, 3
      %s31 = scalar_select %p30, 0, %s29
      %s32 = sadd.s32 1, %s23
      %s33 = scalar_select %p30, %s32, %s23
      %p34 = scmp.ge.s32.totalorder %s33, 1
      %s35 = scalar_select %p34, 0, %s33
      %s37 = sadd.s32 %s36, 1
      %p40 = scmp.eq.s32.totalorder %s16, 2
      %p41 = scmp.ne.s32.totalorder %s36, %s38
      %p42 = scmp.eq.s32.totalorder %s16, 0
      %p43 = por %p41, %p42
      %p44 = scmp.ne.s32.totalorder %s36, %s38
      %p45 = scmp.eq.s32.totalorder %s21, 2
      %p46 = por %p44, %p45
      %p47 = scmp.ne.s32.totalorder %s38, %s39
      %p48 = scmp.eq.s32.totalorder %s21, 0
      %p49 = por %p47, %p48
      %p50 = scmp.ne.s32.totalorder %s38, %s39
      %p51 = scmp.eq.s32.totalorder %s22, 2
      %p52 = por %p50, %p51
      %p54 = scmp.ne.s32.totalorder %s39, %s53
      %p55 = scmp.eq.s32.totalorder %s22, 0
      %p56 = por %p54, %p55
      %s58 = sadd.s32 %s57, 1
      %p61 = scmp.eq.s32.totalorder %s16, 2
      %p62 = scmp.ne.s32.totalorder %s57, %s59
      %p63 = scmp.eq.s32.totalorder %s16, 0
      %p64 = por %p62, %p63
      %p65 = scmp.ne.s32.totalorder %s57, %s59
      %p66 = scmp.eq.s32.totalorder %s21, 2
      %p67 = por %p65, %p66
      %p68 = scmp.ne.s32.totalorder %s59, %s60
      %p69 = scmp.eq.s32.totalorder %s21, 0
      %p70 = por %p68, %p69
      %p71 = scmp.ne.s32.totalorder %s59, %s60
      %p72 = scmp.eq.s32.totalorder %s22, 2
      %p73 = por %p71, %p72
      %p75 = scmp.ne.s32.totalorder %s60, %s74
      %p76 = scmp.eq.s32.totalorder %s22, 0
      %p77 = por %p75, %p76
      %s78 = ssub.s32 %s24, %s31
      %s79 = ssub.s32 %s23, %s35
      %s80 = sor.u32 %s78, %s79
      %p81 = scmp.eq.s32.totalorder %s80, 0
      %s83 = sadd.s32 %s82, 1
      %s84 = scalar_select %p81, %s82, %s83
      %p87 = pneg %p81
      %p88 = scmp.eq.s32.totalorder %s16, 2
      %p89 = por %p87, %p88
      %p90 = scmp.ne.s32.totalorder %s82, %s85
      %p91 = scmp.eq.s32.totalorder %s16, 0
      %p92 = por %p90, %p91
      %p93 = scmp.ne.s32.totalorder %s82, %s85
      %p94 = scmp.eq.s32.totalorder %s21, 2
      %p95 = por %p93, %p94
      %p96 = scmp.ne.s32.totalorder %s85, %s86
      %p97 = scmp.eq.s32.totalorder %s21, 0
      %p98 = por %p96, %p97
      %p99 = scmp.ne.s32.totalorder %s85, %s86
      %p100 = scmp.eq.s32.totalorder %s22, 2
      %p101 = por %p99, %p100
      %p103 = scmp.ne.s32.totalorder %s86, %s102
      %p104 = scmp.eq.s32.totalorder %s22, 0
      %p105 = por %p103, %p104
      %s106 = ssub.s32 %s23, %s35
      %p107 = scmp.eq.s32.totalorder %s106, 0
      %s109 = sadd.s32 %s108, 1
      %s110 = scalar_select %p107, %s108, %s109
      %p113 = pneg %p107
      %p114 = scmp.eq.s32.totalorder %s16, 2
      %p115 = por %p113, %p114
      %p116 = scmp.ne.s32.totalorder %s108, %s111
      %p117 = scmp.eq.s32.totalorder %s16, 0
      %p118 = por %p116, %p117
      %p119 = scmp.ne.s32.totalorder %s108, %s111
      %p120 = scmp.eq.s32.totalorder %s21, 2
      %p121 = por %p119, %p120
      %p122 = scmp.ne.s32.totalorder %s111, %s112
      %p123 = scmp.eq.s32.totalorder %s21, 0
      %p124 = por %p122, %p123
      %p125 = scmp.ne.s32.totalorder %s111, %s112
      %p126 = scmp.eq.s32.totalorder %s22, 2
      %p127 = por %p125, %p126
      %p129 = scmp.ne.s32.totalorder %s112, %s128
      %p130 = scmp.eq.s32.totalorder %s22, 0
      %p131 = por %p129, %p130
      %s132 = ssub.s32 %s23, %s35
      %p133 = scmp.eq.s32.totalorder %s132, 0
      %s135 = sadd.s32 %s134, 1
      %s136 = scalar_select %p133, %s134, %s135
      %p139 = pneg %p133
      %p140 = scmp.eq.s32.totalorder %s16, 2
      %p141 = por %p139, %p140
      %p142 = scmp.ne.s32.totalorder %s134, %s137
      %p143 = scmp.eq.s32.totalorder %s16, 0
      %p144 = por %p142, %p143
      %p145 = scmp.ne.s32.totalorder %s134, %s137
      %p146 = scmp.eq.s32.totalorder %s21, 2
      %p147 = por %p145, %p146
      %p148 = scmp.ne.s32.totalorder %s137, %s138
      %p149 = scmp.eq.s32.totalorder %s21, 0
      %p150 = por %p148, %p149
      %p151 = scmp.ne.s32.totalorder %s137, %s138
      %p152 = scmp.eq.s32.totalorder %s22, 2
      %p153 = por %p151, %p152
      %p155 = scmp.ne.s32.totalorder %s138, %s154
      %p156 = scmp.eq.s32.totalorder %s22, 0
      %p157 = por %p155, %p156
      %p158 = scmp.le.s32.totalorder 1, %s16
      %p159 = scmp.lt.s32.totalorder %s16, 4
      %p160 = pnand %p158, %p159
      %p161 = pneg %p160
      // Predicated region
      $region9: #{tpu_custom_call.1} parent=5 // pred_check
        _
      $region10: #{tpu_custom_call.1} parent=5 // pred_check_branch
        %163 = sbr.rel (%p160) target = $region12
      $region11: #{tpu_custom_call.1} parent=5 // pred_region
        %s164 = ssub.s32 %s16, 1
        // Predicated region
        $region13: #{tpu_custom_call.1} parent=11 // pred_check
          %p165 = pneg %p49
        $region14: #{tpu_custom_call.1} parent=11 // pred_check_branch
          %167 = sbr.rel (%p165) target = $region16
        $region15: #{tpu_custom_call.1} parent=11 // pred_region
          %s169 = ssub.s32 16, 16
          %170 = vsyncadd [#allocation6], %s169
          %173 = dma.hbm_to_smem %s0, 16, [#allocation3], [#allocation6]
        $region16: #{tpu_custom_call.1} parent=11 // pred_fallthru
          _
        // Predicated region
        $region17: #{tpu_custom_call.1} parent=11 // pred_check
          %p174 = pneg %p70
        $region18: #{tpu_custom_call.1} parent=11 // pred_check_branch
          %176 = sbr.rel (%p174) target = $region20
        $region19: #{tpu_custom_call.1} parent=11 // pred_region
          %s178 = ssub.s32 32, 32
          %179 = vsyncadd [#allocation4], %s178
          %s181 = sshll.u32 [#allocation7], 4
          %s182 = int_to_ptr.vmem [resolvable:$true] %s181
          %184 = dma.hbm_to_vmem [thread:$0]  %s1, 32, %s182, [#allocation4]
        $region20: #{tpu_custom_call.1} parent=11 // pred_fallthru
          _
        // Predicated region
        $region21: #{tpu_custom_call.1} parent=11 // pred_check
          %p185 = pneg %p124
        $region22: #{tpu_custom_call.1} parent=11 // pred_check_branch
          %187 = sbr.rel (%p185) target = $region24
        $region23: #{tpu_custom_call.1} parent=11 // pred_region
          %p188 = scmp.lt.s32.totalorder %s25, 0
          %s189 = scalar_select %p188, %s25, 0
          %s190 = scalar_lea.vmem %s3, %s189
        $region24: #{tpu_custom_call.1} parent=11 // pred_fallthru
          _
      $region12: #{tpu_custom_call.1} parent=5 // pred_fallthru
        _
      %p191 = scmp.lt.s32.totalorder %s16, 3
      // Predicated region
      $region25: #{tpu_custom_call.1} parent=5 // pred_check
        %p192 = pneg %p191
      $region26: #{tpu_custom_call.1} parent=5 // pred_check_branch
        %194 = sbr.rel (%p192) target = $region28
      $region27: #{tpu_custom_call.1} parent=5 // pred_region
        // Predicated region
        $region29: #{tpu_custom_call.1} parent=27 // pred_check
          %p195 = pneg %p92
        $region30: #{tpu_custom_call.1} parent=27 // pred_check_branch
          %197 = sbr.rel (%p195) target = $region32
        $region31: #{tpu_custom_call.1} parent=27 // pred_region
          %s198 = sand.u32 %s82, 1
          %s199 = scalar_lea.sflag [#allocation9], %s198
          %s200 = sand.u32 %s82, 1
          %s201 = smul.addr %s200, 32
          %s202 = scalar_lea.vmem [#allocation8], %s201
          %s203 = smul.u32 4, %s23
          %s205 = ssub.s32 512, 512
          %206 = vsyncadd %s199, %s205
          %s207 = smul.addr %s24, 4
          %s208 = sadd.s32 %s203, %s207
          %s209 = smul.addr %s208, 128
          %s210 = scalar_lea.hbm %s2, %s209
          %s211 = sshll.u32 %s202, 4
          %s212 = int_to_ptr.vmem [resolvable:$true] %s211
          %217 = dma.hbm_to_vmem [thread:$0]  %s210, 512, %s212, %s199, 128, 128, 8
        $region32: #{tpu_custom_call.1} parent=27 // pred_fallthru
          _
      $region28: #{tpu_custom_call.1} parent=5 // pred_fallthru
        _
      %p218 = scmp.le.s32.totalorder 1, %s16
      %p219 = scmp.lt.s32.totalorder %s16, 4
      %p220 = pnand %p218, %p219
      %p221 = pneg %p220
      // Predicated region
      $region33: #{tpu_custom_call.1} parent=5 // pred_check
        _
      $region34: #{tpu_custom_call.1} parent=5 // pred_check_branch
        %223 = sbr.rel (%p220) target = $region36
      $region35: #{tpu_custom_call.1} parent=5 // pred_region
        %s224 = ssub.s32 %s16, 1
        // Predicated region
        $region37: #{tpu_custom_call.1} parent=35 // pred_check
          %p225 = pneg %p49
        $region38: #{tpu_custom_call.1} parent=35 // pred_check_branch
          %227 = sbr.rel (%p225) target = $region40
        $region39: #{tpu_custom_call.1} parent=35 // pred_region
          %228 = dma.done [#allocation6], 16
        $region40: #{tpu_custom_call.1} parent=35 // pred_fallthru
          _
        // Predicated region
        $region41: #{tpu_custom_call.1} parent=35 // pred_check
          %p229 = pneg %p70
        $region42: #{tpu_custom_call.1} parent=35 // pred_check_branch
          %231 = sbr.rel (%p229) target = $region44
        $region43: #{tpu_custom_call.1} parent=35 // pred_region
          %232 = dma.done [#allocation4], 32
        $region44: #{tpu_custom_call.1} parent=35 // pred_fallthru
          _
        %s233 = sand.u32 %s85, 1
        %s234 = scalar_lea.sflag [#allocation9], %s233
        %s235 = sand.u32 %s85, 1
        %s236 = smul.addr %s235, 32
        %s237 = scalar_lea.vmem [#allocation8], %s236
        // Predicated region
        $region45: #{tpu_custom_call.1} parent=35 // pred_check
          %p238 = pneg %p98
        $region46: #{tpu_custom_call.1} parent=35 // pred_check_branch
          %240 = sbr.rel (%p238) target = $region48
        $region47: #{tpu_custom_call.1} parent=35 // pred_region
          %241 = dma.done %s234, 512
        $region48: #{tpu_custom_call.1} parent=35 // pred_fallthru
          _
        %242 = sfence
        %p243 = pneg %p49
        %p244 = pneg %p46
        %p245 = pneg %p70
        %p246 = pneg %p67
        %s247 = sand.u32 %s85, 1
        %s248 = scalar_lea.sflag [#allocation9], %s247
        %s249 = sand.u32 %s85, 1
        %s250 = smul.addr %s249, 32
        %s251 = scalar_lea.vmem [#allocation8], %s250
        %p252 = pneg %p98
        %p253 = pneg %p95
        %p254 = scmp.lt.s32.totalorder %s25, 0
        %s255 = scalar_select %p254, %s25, 0
        %s256 = scalar_lea.vmem %s3, %s255
        %p257 = pneg %p124
        %p258 = pneg %p121
        %p259 = pneg %p150
        %p260 = pneg %p147
        %s261 = smul.u32 4, %s25
        %p262 = scmp.lt.s32.totalorder %s25, 0
        %s263 = scalar_select %p262, %s25, 0
        %s264 = scalar_lea.vmem %s3, %s263
        %p265 = scmp.eq.s32.totalorder %s26, 0
        // Predicated region
        $region49: #{tpu_custom_call.1} parent=35 // pred_check
          %p266 = pneg %p265
        $region50: #{tpu_custom_call.1} parent=35 // pred_check_branch
          %268 = sbr.rel (%p266) target = $region52
        $region51: #{tpu_custom_call.1} parent=35 // pred_region
          %s269 = sld [smem:[#allocation3]]
          %v270 = vld [vmem:[%s237] sm:$0xff]
          %v271 = vld [vmem:[%s237 + $0x8] sm:$0xff]
          %v272 = vld [vmem:[%s237 + $0x10] sm:$0xff]
          %v273 = vld [vmem:[%s237 + $0x18] sm:$0xff]
          %v274 = vstv %s269
          %v275 = vmul.f32 %v274, %v270
          %v276 = vmul.f32 %v274, %v271
          %v277 = vmul.f32 %v274, %v272
          %v278 = vmul.f32 %v274, %v273
          %vm279 = vcmask 261120
          %280 = vst.msk [vmem:[#allocation2] sm:$0xff] %vm279, %v275
          %281 = vst.msk [vmem:[#allocation2 + $0x8] sm:$0xff] %vm279, %v276
          %282 = vst.msk [vmem:[#allocation2 + $0x10] sm:$0xff] %vm279, %v277
          %283 = vst.msk [vmem:[#allocation2 + $0x18] sm:$0xff] %vm279, %v278
        $region52: #{tpu_custom_call.1} parent=35 // pred_fallthru
          _
        %p284 = scmp.gt.s32.totalorder %s26, 0
        // Predicated region
        $region53: #{tpu_custom_call.1} parent=35 // pred_check
          %p285 = pneg %p284
        $region54: #{tpu_custom_call.1} parent=35 // pred_check_branch
          %287 = sbr.rel (%p285) target = $region56
        $region55: #{tpu_custom_call.1} parent=35 // pred_region
          %v288 = vld [vmem:[#allocation2] sm:$0xff]
          %v289 = vld [vmem:[#allocation2 + $0x8] sm:$0xff]
          %v290 = vld [vmem:[#allocation2 + $0x10] sm:$0xff]
          %v291 = vld [vmem:[#allocation2 + $0x18] sm:$0xff]
          %s292 = sld [smem:[#allocation3 + %s26]]
          %v293 = vld [vmem:[%s237] sm:$0xff]
          %v294 = vld [vmem:[%s237 + $0x8] sm:$0xff]
          %v295 = vld [vmem:[%s237 + $0x10] sm:$0xff]
          %v296 = vld [vmem:[%s237 + $0x18] sm:$0xff]
          %v297 = vstv %s292
          %v298 = vmul.f32 %v297, %v293
          %v299 = vmul.f32 %v297, %v294
          %v300 = vmul.f32 %v297, %v295
          %v301 = vmul.f32 %v297, %v296
          %v302 = vadd.f32 %v288, %v298
          %v303 = vadd.f32 %v289, %v299
          %v304 = vadd.f32 %v290, %v300
          %v305 = vadd.f32 %v291, %v301
          %vm306 = vcmask 261120
          %307 = vst.msk [vmem:[#allocation2] sm:$0xff] %vm306, %v302
          %308 = vst.msk [vmem:[#allocation2 + $0x8] sm:$0xff] %vm306, %v303
          %309 = vst.msk [vmem:[#allocation2 + $0x10] sm:$0xff] %vm306, %v304
          %310 = vst.msk [vmem:[#allocation2 + $0x18] sm:$0xff] %vm306, %v305
        $region56: #{tpu_custom_call.1} parent=35 // pred_fallthru
          _
        %p311 = scmp.eq.s32.totalorder %s26, 2
        // Predicated region
        $region57: #{tpu_custom_call.1} parent=35 // pred_check
          %p312 = pneg %p311
        $region58: #{tpu_custom_call.1} parent=35 // pred_check_branch
          %314 = sbr.rel (%p312) target = $region60
        $region59: #{tpu_custom_call.1} parent=35 // pred_region
          %v315 = vld [vmem:[#allocation7] sm:$0x3]
          %v316 = vld [vmem:[#allocation2] sm:$0xff]
          %v317 = vld [vmem:[#allocation2 + $0x8] sm:$0xff]
          %v318 = vld [vmem:[#allocation2 + $0x10] sm:$0xff]
          %v319 = vld [vmem:[#allocation2 + $0x18] sm:$0xff]
          %v320 = vld [vmem:[%s264] sm:$0x1]
          %v322 = vlaneseq
          %v323 = vshrl.u32 %v322, 7
          %v324 = vsub.s32 0, %v323
          %v325 = vrot.slane %v320, %v324
          %vm327 = vcmask 261120
          %v329 = vsel %vm327, %v315, 0
          %v332 = vsel %vm327, %v316, 0
          %v335 = vsel %vm327, %v317, 0
          %v338 = vsel %vm327, %v318, 0
          %v341 = vsel %vm327, %v319, 0
          %343 = vmatprep.subr.mxu0 0.0
          %344 = vmatpush1.xpose.msra.mxu0 0.0
          %345 = vmatprep.subr.mxu0 0.0
          %346 = vmatpush1.xpose.msra.mxu0 0.0
          %347 = vmatprep.subr.mxu0 0.0
          %348 = vmatpush1.xpose.msra.mxu0 0.0
          %349 = vmatprep.subr.mxu0 0.0
          %350 = vmatpush1.xpose.msra.mxu0 0.0
          %351 = vmatprep.subr.mxu0 0.0
          %352 = vmatpush1.xpose.msra.mxu0 0.0
          %353 = vmatprep.subr.mxu0 0.0
          %354 = vmatpush1.xpose.msra.mxu0 0.0
          %355 = vmatprep.subr.mxu0 0.0
          %356 = vmatpush1.xpose.msra.mxu0 0.0
          %357 = vmatprep.subr.mxu0 0.0
          %358 = vmatpush1.xpose.msra.mxu0 0.0
          %359 = vmatprep.subr.mxu0 0.0
          %360 = vmatpush1.xpose.msra.mxu0 0.0
          %361 = vmatprep.subr.mxu0 0.0
          %362 = vmatpush1.xpose.msra.mxu0 0.0
          %363 = vmatprep.subr.mxu0 0.0
          %364 = vmatpush1.xpose.msra.mxu0 0.0
          %365 = vmatprep.subr.mxu0 0.0
          %366 = vmatpush1.xpose.msra.mxu0 0.0
          %367 = vmatprep.subr.mxu0 0.0
          %368 = vmatpush1.xpose.msra.mxu0 %v341
          %369 = vmatprep.subr.mxu0 0.0
          %370 = vmatpush1.xpose.msra.mxu0 %v338
          %371 = vmatprep.subr.mxu0 0.0
          %372 = vmatpush1.xpose.msra.mxu0 %v335
          %373 = vmatprep.subr.mxu0 0.0
          %374 = vmatpush1.xpose.msra.mxu0 %v332
          %375 = vmatprep.subr.mxu0 0.0
          %376 = vmatpush2.xpose.msra.mxu0 0.0
          %377 = vmatprep.subr.mxu0 0.0
          %378 = vmatpush2.xpose.msra.mxu0 0.0
          %379 = vmatprep.subr.mxu0 0.0
          %380 = vmatpush2.xpose.msra.mxu0 0.0
          %381 = vmatprep.subr.mxu0 0.0
          %382 = vmatpush2.xpose.msra.mxu0 0.0
          %383 = vmatprep.subr.mxu0 0.0
          %384 = vmatpush2.xpose.msra.mxu0 0.0
          %385 = vmatprep.subr.mxu0 0.0
          %386 = vmatpush2.xpose.msra.mxu0 0.0
          %387 = vmatprep.subr.mxu0 0.0
          %388 = vmatpush2.xpose.msra.mxu0 0.0
          %389 = vmatprep.subr.mxu0 0.0
          %390 = vmatpush2.xpose.msra.mxu0 0.0
          %391 = vmatprep.subr.mxu0 0.0
          %392 = vmatpush2.xpose.msra.mxu0 0.0
          %393 = vmatprep.subr.mxu0 0.0
          %394 = vmatpush2.xpose.msra.mxu0 0.0
          %395 = vmatprep.subr.mxu0 0.0
          %396 = vmatpush2.xpose.msra.mxu0 0.0
          %397 = vmatprep.subr.mxu0 0.0
          %398 = vmatpush2.xpose.msra.mxu0 0.0
          %399 = vmatprep.subr.mxu0 0.0
          %400 = vmatpush2.xpose.msra.mxu0 0.0
          %401 = vmatprep.subr.mxu0 0.0
          %402 = vmatpush2.xpose.msra.mxu0 0.0
          %403 = vmatprep.subr.mxu0 0.0
          %404 = vmatpush2.xpose.msra.mxu0 0.0
          %405 = vmatprep.subr.mxu0 0.0
          %406 = vmatpush2.xpose.msra.mxu0 0.0
          %407 = vmatprep.mubr.f32.mxu0 0.0
          %408 = vmatmul.mubr.f32.gmra.mxu0 %v329
          %v409 = vpop.f32.mrf.mxu0
          %v410 = vadd.f32 %v325, %v409
          %v411 = vpop.f32.mrf.mxu0
          %412 = vdwg.mxu0
          %vm413 = vcmask 254976
          %414 = vst.msk [vmem:[#allocation10] sm:$0x3] %vm413, %v410
        $region60: #{tpu_custom_call.1} parent=35 // pred_fallthru
          _
        // Predicated region
        $region61: #{tpu_custom_call.1} parent=35 // pred_check
          %p415 = pneg %p147
        $region62: #{tpu_custom_call.1} parent=35 // pred_check_branch
          %417 = sbr.rel (%p415) target = $region64
        $region63: #{tpu_custom_call.1} parent=35 // pred_region
          %s419 = ssub.s32 32, 32
          %420 = vsyncadd [#allocation5], %s419
          %s421 = smul.addr %s25, 32
          %s422 = scalar_lea.hbm %s4, %s421
          %s424 = sshll.u32 [#allocation10], 4
          %s425 = int_to_ptr.vmem [resolvable:$true] %s424
          %427 = dma.vmem_to_hbm [thread:$0]  %s425, 32, %s422, [#allocation5]
        $region64: #{tpu_custom_call.1} parent=35 // pred_fallthru
          _
        // Predicated region
        $region65: #{tpu_custom_call.1} parent=35 // pred_check
          %p428 = pneg %p147
        $region66: #{tpu_custom_call.1} parent=35 // pred_check_branch
          %430 = sbr.rel (%p428) target = $region68
        $region67: #{tpu_custom_call.1} parent=35 // pred_region
          %431 = dma.done [#allocation5], 32
        $region68: #{tpu_custom_call.1} parent=35 // pred_fallthru
          _
      $region36: #{tpu_custom_call.1} parent=5 // pred_fallthru
        _
      %p432 = scmp.le.s32.totalorder 2, %s16
      // Predicated region
      $region69: #{tpu_custom_call.1} parent=5 // pred_check
        %p433 = pneg %p432
      $region70: #{tpu_custom_call.1} parent=5 // pred_check_branch
        %435 = sbr.rel (%p433) target = $region72
      $region71: #{tpu_custom_call.1} parent=5 // pred_region
        %s436 = ssub.s32 %s16, 2
      $region72: #{tpu_custom_call.1} parent=5 // pred_fallthru
        _
    $region6: #{tpu_custom_call.1} parent=1 // loop_footer
      %s20 = sadd.s32 1, %s16
    $region7: #{tpu_custom_call.1} parent=1 // loop_footer_branch
      %15 = sbr.rel target = $region3
    $region8: #{tpu_custom_call.1} parent=1 // loop_exit
      _
    %437 = vsyncpa [#allocation4], 1
    %s438 = scalar_lea.sflag [#allocation4], 1
    %439 = vsyncpa %s438, 1
    %440 = vsyncpa [#allocation9], 1
    %s441 = scalar_lea.sflag [#allocation9], 1
    %442 = vsyncpa %s441, 1
    %443 = vsyncpa [#allocation5], 1
    %s444 = scalar_lea.sflag [#allocation5], 1
    %445 = vsyncpa %s444, 1
    %446 = vsyncpa [#allocation6], 1
    %s447 = scalar_lea.sflag [#allocation6], 1
    %448 = vsyncpa %s447, 1

</llo_original>
